<compile_context>
chip_gen: v5e
topology: v5e:2x2
jax: 0.10.0
libtpu: 0.0.40
codegen_flags: <defaults>
</compile_context>

<pallas_src>
import functools

import jax
import jax.numpy as jnp
import numpy as np
from jax.experimental import pallas as pl
from jax.experimental.pallas import tpu as pltpu

_TWO_PI = 2.0 * np.pi


def _round_up(x, m):
    return ((x + m - 1) // m) * m


def _saw_kernel(f0_ref, ph0_ref, sig_ref, fph_ref, *, fs, amps, remove_nyq):
    """One (Bt, T) block of rows.

    f0_ref  : (Bt, T) f32  fundamental frequency per sample (Hz)
    ph0_ref : (Bt, 1) f32  initial phase per row
    sig_ref : (Bt, T) f32  output signal
    fph_ref : (Bt, 1) f32  output final phase (mod 2*pi)
    """
    f0 = f0_ref[...]                                   # (Bt, T)
    ph0 = ph0_ref[...]                                 # (Bt, 1)
    t = f0.shape[-1]

    # Per-sample phase increments.
    w = (_TWO_PI / fs) * f0                            # (Bt, T)

    # ---- inclusive prefix sum over time: log2(T) shift-and-add scan (XLU roll + VPU) ----
    lane = jax.lax.broadcasted_iota(jnp.int32, w.shape, 1)
    acc = w
    shift = 1
    while shift < t:
        rolled = pltpu.roll(acc, shift=shift, axis=1)  # XLU lane rotation (free-ish slot)
        acc = acc + jnp.where(lane >= shift, rolled, 0.0)
        shift *= 2
    phase = acc + ph0                                  # (Bt, T)

    # Wrap once before the harmonic expansion: sin(k*phi) == sin(k*phase) for integer k.
    phi = phase - _TWO_PI * jnp.floor(phase * (1.0 / _TWO_PI))

    # ---- harmonic bank via the sin/cos Chebyshev recurrence (1 sin + 1 cos on the EUP) ----
    s_prev = jnp.zeros_like(phi)                       # sin(0 * phi)
    s_cur = jnp.sin(phi)                               # sin(1 * phi)
    c2 = 2.0 * jnp.cos(phi)
    half_fs = 0.5 * fs
    n_harm = len(amps)

    sig = jnp.zeros_like(phi)
    for k, amp_k in enumerate(amps, start=1):          # amps already include `ratio`
        if remove_nyq:
            # aa = (k*f0 < fs/2) + 1e-4  folded into two compile-time coefficients.
            coef = jnp.where(f0 < (half_fs / float(k)),
                             amp_k * (1.0 + 1e-4), amp_k * 1e-4)
            sig = sig + coef * s_cur
        else:
            sig = sig + amp_k * s_cur
        if k < n_harm:
            s_next = c2 * s_cur - s_prev
            s_prev, s_cur = s_cur, s_next

    # Voiced/unvoiced mask (f0 > 0).
    sig_ref[...] = jnp.where(f0 > 0.0, sig, 0.0)

    # Final phase from a single lane reduction (padded lanes contribute 0).
    total = jnp.sum(w, axis=1, keepdims=True) + ph0    # (Bt, 1)
    fph_ref[...] = jnp.mod(total, _TWO_PI)


def sawtooth_oscillator(f0, amplitudes, *, fs, ratio,
                        initial_phase=None, is_remove_above_nyquist=True):
    """f0: (B, T, 1) Hz, initial_phase: (B, 1, 1) or None.
    Returns (signal: (B, T), final_phase: (B, 1, 1))."""
    B, T, _ = f0.shape
    f0 = f0.astype(jnp.float32)
    if initial_phase is None:
        initial_phase = jnp.zeros((B, 1, 1), jnp.float32)

    # amplitudes / ratio are module-construction parameters -> compile-time constants.
    amps = tuple(float(a) * float(ratio)
                 for a in np.asarray(amplitudes, dtype=np.float32).reshape(-1))

    # Layout-free reshapes (trailing dim is 1): time on the 128-lane axis,
    # batch rows on the 8-sublane axis.
    f0_2d = f0.reshape(B, T)
    ph0_2d = initial_phase.astype(jnp.float32).reshape(B, 1)

    # Row batching: >= 8 rows per block (full sublanes), lane-dense time axis.
    bt = min(128, _round_up(B, 8))
    b_pad = _round_up(B, bt)
    t_pad = _round_up(T, 128)
    if b_pad != B or t_pad != T:
        f0_2d = jnp.pad(f0_2d, ((0, b_pad - B), (0, t_pad - T)))
        ph0_2d = jnp.pad(ph0_2d, ((0, b_pad - B), (0, 0)))

    kernel = functools.partial(
        _saw_kernel, fs=float(fs), amps=amps,
        remove_nyq=bool(is_remove_above_nyquist))

    sig, fph = pl.pallas_call(
        kernel,
        grid=(b_pad // bt,),
        in_specs=[
            pl.BlockSpec((bt, t_pad), lambda i: (i, 0)),   # f0 rows
            pl.BlockSpec((bt, 1), lambda i: (i, 0)),       # initial phase
        ],
        out_specs=[
            pl.BlockSpec((bt, t_pad), lambda i: (i, 0)),   # signal rows (lane-dense)
            pl.BlockSpec((bt, 1), lambda i: (i, 0)),       # final phase
        ],
        out_shape=(jax.ShapeDtypeStruct((b_pad, t_pad), jnp.float32),
                   jax.ShapeDtypeStruct((b_pad, 1), jnp.float32)),
        compiler_params=pltpu.CompilerParams(dimension_semantics=("parallel",)),
    )(f0_2d, ph0_2d)

    signal = sig[:B, :T]                  # (B, T)
    final_phase = fph[:B].reshape(B, 1, 1)
    return signal, final_phase


def _reference(f0, amplitudes, fs, ratio, initial_phase, remove_nyq):
    """Pure-JAX replica of the PyTorch forward, for verification."""
    mask = (f0 > 0).astype(jnp.float32)
    phase = jnp.cumsum(2.0 * np.pi * f0 / fs, axis=1) + initial_phase   # (B, T, 1)
    K = amplitudes.shape[0]
    harm = jnp.arange(1, K + 1, dtype=jnp.float32)
    phases = phase * harm                                               # (B, T, K)
    amp = amplitudes * ratio
    if remove_nyq:
        aa = (f0 * harm < fs / 2.0).astype(jnp.float32) + 1e-4
        amp = amp * aa
    signal = (jnp.sin(phases) * amp).sum(-1, keepdims=True) * mask
    final_phase = jnp.mod(phase[:, -1:, :], 2.0 * np.pi)
    return signal[..., 0], final_phase


def _check(signal, final_phase, sig_ref, fph_ref):
    np.testing.assert_allclose(np.asarray(signal), np.asarray(sig_ref),
                               atol=2e-2, rtol=0)
    dphi = np.abs(np.asarray(final_phase) - np.asarray(fph_ref))
    dphi = np.minimum(dphi, 2.0 * np.pi - dphi)   # compare phases modulo 2*pi
    assert np.all(dphi < 1e-2)


if __name__ == "__main__":
    key = jax.random.PRNGKey(0)
    fs = 16000.0
    ratio = 0.25

    # --- config 1: nyquist removal ON, explicit initial phase, voiced/unvoiced mask ---
    B, T, K = 2, 128, 8
    amplitudes = 1.0 / jnp.arange(1, K + 1, dtype=jnp.float32)   # classic sawtooth 1/k
    k_f0, k_mask, k_ph, k_f0b = jax.random.split(key, 4)
    f0 = jax.random.uniform(k_f0, (B, T, 1), jnp.float32, 80.0, 1400.0)
    unvoiced = jax.random.bernoulli(k_mask, 0.2, (B, T, 1))
    f0 = jnp.where(unvoiced, 0.0, f0)
    initial_phase = jax.random.uniform(k_ph, (B, 1, 1), jnp.float32, 0.0, 2.0 * np.pi)

    signal, final_phase = sawtooth_oscillator(
        f0, amplitudes, fs=fs, ratio=ratio, initial_phase=initial_phase,
        is_remove_above_nyquist=True)
    jax.block_until_ready((signal, final_phase))
    assert signal.shape == (B, T) and final_phase.shape == (B, 1, 1)
    sig_r, fph_r = _reference(f0, amplitudes, fs, ratio, initial_phase, True)
    _check(signal, final_phase, sig_r, fph_r)

    # --- config 2: nyquist removal OFF, default (zero) initial phase, different B/K ---
    B2, T2, K2 = 5, 128, 6
    amplitudes2 = 1.0 / jnp.arange(1, K2 + 1, dtype=jnp.float32)
    f0_2 = jax.random.uniform(k_f0b, (B2, T2, 1), jnp.float32, 60.0, 900.0)

    signal2, final_phase2 = sawtooth_oscillator(
        f0_2, amplitudes2, fs=fs, ratio=ratio, initial_phase=None,
        is_remove_above_nyquist=False)
    jax.block_until_ready((signal2, final_phase2))
    assert signal2.shape == (B2, T2) and final_phase2.shape == (B2, 1, 1)
    sig_r2, fph_r2 = _reference(f0_2, amplitudes2, fs, ratio,
                                jnp.zeros((B2, 1, 1), jnp.float32), False)
    _check(signal2, final_phase2, sig_r2, fph_r2)

    print("KERNEL_OK")
</pallas_src>

<mosaic_0001>
module attributes {stable_mosaic.version = 11 : i64} {
  func.func @_saw_kernel(%arg0: i32, %arg1: memref<8x128xf32, #tpu.memory_space<vmem>>, %arg2: memref<8x1xf32, #tpu.memory_space<vmem>>, %arg3: memref<8x128xf32, #tpu.memory_space<vmem>>, %arg4: memref<8x1xf32, #tpu.memory_space<vmem>>) attributes {dimension_semantics = [#tpu.dimension_semantics<parallel>], iteration_bounds = array<i64: 1>, scalar_prefetch = 0 : i64, scratch_operands = 0 : i64, tpu.core_type = #tpu.core_type<tc>, window_params = [{transform_indices = @transform_0, window_bounds = array<i64: 8, 128>}, {transform_indices = @transform_1, window_bounds = array<i64: 8, 1>}, {transform_indices = @transform_2, window_bounds = array<i64: 8, 128>}, {transform_indices = @transform_3, window_bounds = array<i64: 8, 1>}]} {
    %c0 = arith.constant 0 : index
    %c0_0 = arith.constant 0 : index
    %0 = vector.load %arg1[%c0, %c0_0] : memref<8x128xf32, #tpu.memory_space<vmem>>, vector<8x128xf32>
    %c0_1 = arith.constant 0 : index
    %c0_2 = arith.constant 0 : index
    %1 = vector.load %arg2[%c0_1, %c0_2] : memref<8x1xf32, #tpu.memory_space<vmem>>, vector<8x1xf32>
    %cst = arith.constant 3.9269909E-4 : f32
    %2 = vector.broadcast %cst : f32 to vector<8x128xf32>
    %3 = arith.mulf %2, %0 : vector<8x128xf32>
    %4 = tpu.iota {dimensions = array<i32: 1>} : vector<8x128xi32>
    %c1_i32 = arith.constant 1 : i32
    %5 = tpu.dynamic_rotate %3 by %c1_i32 dim 1 : vector<8x128xf32>, i32 -> vector<8x128xf32>
    %c1_i32_3 = arith.constant 1 : i32
    %6 = vector.broadcast %c1_i32_3 : i32 to vector<8x128xi32>
    %7 = arith.cmpi sge, %4, %6 : vector<8x128xi32>
    %cst_4 = arith.constant 0.000000e+00 : f32
    %8 = vector.broadcast %cst_4 : f32 to vector<8x128xf32>
    %9 = arith.select %7, %5, %8 : vector<8x128xi1>, vector<8x128xf32>
    %10 = arith.addf %3, %9 : vector<8x128xf32>
    %c2_i32 = arith.constant 2 : i32
    %11 = tpu.dynamic_rotate %10 by %c2_i32 dim 1 : vector<8x128xf32>, i32 -> vector<8x128xf32>
    %c2_i32_5 = arith.constant 2 : i32
    %12 = vector.broadcast %c2_i32_5 : i32 to vector<8x128xi32>
    %13 = arith.cmpi sge, %4, %12 : vector<8x128xi32>
    %cst_6 = arith.constant 0.000000e+00 : f32
    %14 = vector.broadcast %cst_6 : f32 to vector<8x128xf32>
    %15 = arith.select %13, %11, %14 : vector<8x128xi1>, vector<8x128xf32>
    %16 = arith.addf %10, %15 : vector<8x128xf32>
    %c4_i32 = arith.constant 4 : i32
    %17 = tpu.dynamic_rotate %16 by %c4_i32 dim 1 : vector<8x128xf32>, i32 -> vector<8x128xf32>
    %c4_i32_7 = arith.constant 4 : i32
    %18 = vector.broadcast %c4_i32_7 : i32 to vector<8x128xi32>
    %19 = arith.cmpi sge, %4, %18 : vector<8x128xi32>
    %cst_8 = arith.constant 0.000000e+00 : f32
    %20 = vector.broadcast %cst_8 : f32 to vector<8x128xf32>
    %21 = arith.select %19, %17, %20 : vector<8x128xi1>, vector<8x128xf32>
    %22 = arith.addf %16, %21 : vector<8x128xf32>
    %c8_i32 = arith.constant 8 : i32
    %23 = tpu.dynamic_rotate %22 by %c8_i32 dim 1 : vector<8x128xf32>, i32 -> vector<8x128xf32>
    %c8_i32_9 = arith.constant 8 : i32
    %24 = vector.broadcast %c8_i32_9 : i32 to vector<8x128xi32>
    %25 = arith.cmpi sge, %4, %24 : vector<8x128xi32>
    %cst_10 = arith.constant 0.000000e+00 : f32
    %26 = vector.broadcast %cst_10 : f32 to vector<8x128xf32>
    %27 = arith.select %25, %23, %26 : vector<8x128xi1>, vector<8x128xf32>
    %28 = arith.addf %22, %27 : vector<8x128xf32>
    %c16_i32 = arith.constant 16 : i32
    %29 = tpu.dynamic_rotate %28 by %c16_i32 dim 1 : vector<8x128xf32>, i32 -> vector<8x128xf32>
    %c16_i32_11 = arith.constant 16 : i32
    %30 = vector.broadcast %c16_i32_11 : i32 to vector<8x128xi32>
    %31 = arith.cmpi sge, %4, %30 : vector<8x128xi32>
    %cst_12 = arith.constant 0.000000e+00 : f32
    %32 = vector.broadcast %cst_12 : f32 to vector<8x128xf32>
    %33 = arith.select %31, %29, %32 : vector<8x128xi1>, vector<8x128xf32>
    %34 = arith.addf %28, %33 : vector<8x128xf32>
    %c32_i32 = arith.constant 32 : i32
    %35 = tpu.dynamic_rotate %34 by %c32_i32 dim 1 : vector<8x128xf32>, i32 -> vector<8x128xf32>
    %c32_i32_13 = arith.constant 32 : i32
    %36 = vector.broadcast %c32_i32_13 : i32 to vector<8x128xi32>
    %37 = arith.cmpi sge, %4, %36 : vector<8x128xi32>
    %cst_14 = arith.constant 0.000000e+00 : f32
    %38 = vector.broadcast %cst_14 : f32 to vector<8x128xf32>
    %39 = arith.select %37, %35, %38 : vector<8x128xi1>, vector<8x128xf32>
    %40 = arith.addf %34, %39 : vector<8x128xf32>
    %c64_i32 = arith.constant 64 : i32
    %41 = tpu.dynamic_rotate %40 by %c64_i32 dim 1 : vector<8x128xf32>, i32 -> vector<8x128xf32>
    %c64_i32_15 = arith.constant 64 : i32
    %42 = vector.broadcast %c64_i32_15 : i32 to vector<8x128xi32>
    %43 = arith.cmpi sge, %4, %42 : vector<8x128xi32>
    %cst_16 = arith.constant 0.000000e+00 : f32
    %44 = vector.broadcast %cst_16 : f32 to vector<8x128xf32>
    %45 = arith.select %43, %41, %44 : vector<8x128xi1>, vector<8x128xf32>
    %46 = arith.addf %40, %45 : vector<8x128xf32>
    %47 = vector.broadcast %1 : vector<8x1xf32> to vector<8x128xf32>
    %48 = arith.addf %46, %47 : vector<8x128xf32>
    %cst_17 = arith.constant 0.159154937 : f32
    %49 = vector.broadcast %cst_17 : f32 to vector<8x128xf32>
    %50 = arith.mulf %48, %49 : vector<8x128xf32>
    %51 = math.floor %50 : vector<8x128xf32>
    %cst_18 = arith.constant 6.28318548 : f32
    %52 = vector.broadcast %cst_18 : f32 to vector<8x128xf32>
    %53 = arith.mulf %52, %51 : vector<8x128xf32>
    %54 = arith.subf %48, %53 : vector<8x128xf32>
    %cst_19 = arith.constant 0.000000e+00 : f32
    %55 = vector.broadcast %cst_19 : f32 to vector<8x128xf32>
    %56 = math.sin %54 : vector<8x128xf32>
    %57 = math.cos %54 : vector<8x128xf32>
    %cst_20 = arith.constant 2.000000e+00 : f32
    %58 = vector.broadcast %cst_20 : f32 to vector<8x128xf32>
    %59 = arith.mulf %58, %57 : vector<8x128xf32>
    %cst_21 = arith.constant 0.000000e+00 : f32
    %60 = vector.broadcast %cst_21 : f32 to vector<8x128xf32>
    %cst_22 = arith.constant 8.000000e+03 : f32
    %61 = vector.broadcast %cst_22 : f32 to vector<8x128xf32>
    %62 = arith.cmpf olt, %0, %61 : vector<8x128xf32>
    %cst_23 = arith.constant 2.500250e-01 : f32
    %cst_24 = arith.constant 2.500000e-05 : f32
    %63 = vector.broadcast %cst_23 : f32 to vector<8x128xf32>
    %64 = vector.broadcast %cst_24 : f32 to vector<8x128xf32>
    %65 = arith.select %62, %63, %64 : vector<8x128xi1>, vector<8x128xf32>
    %66 = arith.mulf %65, %56 : vector<8x128xf32>
    %67 = arith.addf %60, %66 : vector<8x128xf32>
    %68 = arith.mulf %59, %56 : vector<8x128xf32>
    %69 = arith.subf %68, %55 : vector<8x128xf32>
    %cst_25 = arith.constant 4.000000e+03 : f32
    %70 = vector.broadcast %cst_25 : f32 to vector<8x128xf32>
    %71 = arith.cmpf olt, %0, %70 : vector<8x128xf32>
    %cst_26 = arith.constant 0.125012502 : f32
    %cst_27 = arith.constant 1.250000e-05 : f32
    %72 = vector.broadcast %cst_26 : f32 to vector<8x128xf32>
    %73 = vector.broadcast %cst_27 : f32 to vector<8x128xf32>
    %74 = arith.select %71, %72, %73 : vector<8x128xi1>, vector<8x128xf32>
    %75 = arith.mulf %74, %69 : vector<8x128xf32>
    %76 = arith.addf %67, %75 : vector<8x128xf32>
    %77 = arith.mulf %59, %69 : vector<8x128xf32>
    %78 = arith.subf %77, %56 : vector<8x128xf32>
    %cst_28 = arith.constant 2666.66675 : f32
    %79 = vector.broadcast %cst_28 : f32 to vector<8x128xf32>
    %80 = arith.cmpf olt, %0, %79 : vector<8x128xf32>
    %cst_29 = arith.constant 0.0833416655 : f32
    %cst_30 = arith.constant 8.33333342E-6 : f32
    %81 = vector.broadcast %cst_29 : f32 to vector<8x128xf32>
    %82 = vector.broadcast %cst_30 : f32 to vector<8x128xf32>
    %83 = arith.select %80, %81, %82 : vector<8x128xi1>, vector<8x128xf32>
    %84 = arith.mulf %83, %78 : vector<8x128xf32>
    %85 = arith.addf %76, %84 : vector<8x128xf32>
    %86 = arith.mulf %59, %78 : vector<8x128xf32>
    %87 = arith.subf %86, %69 : vector<8x128xf32>
    %cst_31 = arith.constant 2.000000e+03 : f32
    %88 = vector.broadcast %cst_31 : f32 to vector<8x128xf32>
    %89 = arith.cmpf olt, %0, %88 : vector<8x128xf32>
    %cst_32 = arith.constant 0.062506251 : f32
    %cst_33 = arith.constant 6.250000e-06 : f32
    %90 = vector.broadcast %cst_32 : f32 to vector<8x128xf32>
    %91 = vector.broadcast %cst_33 : f32 to vector<8x128xf32>
    %92 = arith.select %89, %90, %91 : vector<8x128xi1>, vector<8x128xf32>
    %93 = arith.mulf %92, %87 : vector<8x128xf32>
    %94 = arith.addf %85, %93 : vector<8x128xf32>
    %95 = arith.mulf %59, %87 : vector<8x128xf32>
    %96 = arith.subf %95, %78 : vector<8x128xf32>
    %cst_34 = arith.constant 1.600000e+03 : f32
    %97 = vector.broadcast %cst_34 : f32 to vector<8x128xf32>
    %98 = arith.cmpf olt, %0, %97 : vector<8x128xf32>
    %cst_35 = arith.constant 5.000500e-02 : f32
    %cst_36 = arith.constant 5.000000e-06 : f32
    %99 = vector.broadcast %cst_35 : f32 to vector<8x128xf32>
    %100 = vector.broadcast %cst_36 : f32 to vector<8x128xf32>
    %101 = arith.select %98, %99, %100 : vector<8x128xi1>, vector<8x128xf32>
    %102 = arith.mulf %101, %96 : vector<8x128xf32>
    %103 = arith.addf %94, %102 : vector<8x128xf32>
    %104 = arith.mulf %59, %96 : vector<8x128xf32>
    %105 = arith.subf %104, %87 : vector<8x128xf32>
    %cst_37 = arith.constant 1333.33337 : f32
    %106 = vector.broadcast %cst_37 : f32 to vector<8x128xf32>
    %107 = arith.cmpf olt, %0, %106 : vector<8x128xf32>
    %cst_38 = arith.constant 0.0416708328 : f32
    %cst_39 = arith.constant 4.16666671E-6 : f32
    %108 = vector.broadcast %cst_38 : f32 to vector<8x128xf32>
    %109 = vector.broadcast %cst_39 : f32 to vector<8x128xf32>
    %110 = arith.select %107, %108, %109 : vector<8x128xi1>, vector<8x128xf32>
    %111 = arith.mulf %110, %105 : vector<8x128xf32>
    %112 = arith.addf %103, %111 : vector<8x128xf32>
    %113 = arith.mulf %59, %105 : vector<8x128xf32>
    %114 = arith.subf %113, %96 : vector<8x128xf32>
    %cst_40 = arith.constant 1142.85718 : f32
    %115 = vector.broadcast %cst_40 : f32 to vector<8x128xf32>
    %116 = arith.cmpf olt, %0, %115 : vector<8x128xf32>
    %cst_41 = arith.constant 0.0357178599 : f32
    %cst_42 = arith.constant 3.57142881E-6 : f32
    %117 = vector.broadcast %cst_41 : f32 to vector<8x128xf32>
    %118 = vector.broadcast %cst_42 : f32 to vector<8x128xf32>
    %119 = arith.select %116, %117, %118 : vector<8x128xi1>, vector<8x128xf32>
    %120 = arith.mulf %119, %114 : vector<8x128xf32>
    %121 = arith.addf %112, %120 : vector<8x128xf32>
    %122 = arith.mulf %59, %114 : vector<8x128xf32>
    %123 = arith.subf %122, %105 : vector<8x128xf32>
    %cst_43 = arith.constant 1.000000e+03 : f32
    %124 = vector.broadcast %cst_43 : f32 to vector<8x128xf32>
    %125 = arith.cmpf olt, %0, %124 : vector<8x128xf32>
    %cst_44 = arith.constant 0.0312531255 : f32
    %cst_45 = arith.constant 3.125000e-06 : f32
    %126 = vector.broadcast %cst_44 : f32 to vector<8x128xf32>
    %127 = vector.broadcast %cst_45 : f32 to vector<8x128xf32>
    %128 = arith.select %125, %126, %127 : vector<8x128xi1>, vector<8x128xf32>
    %129 = arith.mulf %128, %123 : vector<8x128xf32>
    %130 = arith.addf %121, %129 : vector<8x128xf32>
    %cst_46 = arith.constant 0.000000e+00 : f32
    %131 = vector.broadcast %cst_46 : f32 to vector<8x128xf32>
    %132 = arith.cmpf ogt, %0, %131 : vector<8x128xf32>
    %cst_47 = arith.constant 0.000000e+00 : f32
    %133 = vector.broadcast %cst_47 : f32 to vector<8x128xf32>
    %134 = arith.select %132, %130, %133 : vector<8x128xi1>, vector<8x128xf32>
    %c0_48 = arith.constant 0 : index
    %c0_49 = arith.constant 0 : index
    %135 = vector.load %arg3[%c0_48, %c0_49] : memref<8x128xf32, #tpu.memory_space<vmem>>, vector<8x128xf32>
    tpu.vector_store %arg3[%c0_48, %c0_49], %134 {strides = array<i32>} : memref<8x128xf32, #tpu.memory_space<vmem>>, vector<8x128xf32>,
    %cst_50 = arith.constant dense<0.000000e+00> : vector<8xf32>
    %136 = vector.multi_reduction <add>, %3, %cst_50 [1] : vector<8x128xf32> to vector<8xf32>
    %137 = vector.shape_cast %136 : vector<8xf32> to vector<8x1xf32>
    %138 = arith.addf %137, %1 : vector<8x1xf32>
    %cst_51 = arith.constant 6.28318548 : f32
    %139 = vector.broadcast %cst_51 : f32 to vector<8x1xf32>
    %140 = arith.remf %138, %139 : vector<8x1xf32>
    %cst_52 = arith.constant 0.000000e+00 : f32
    %141 = vector.broadcast %cst_52 : f32 to vector<8x1xf32>
    %142 = arith.cmpf one, %140, %141 : vector<8x1xf32>
    %cst_53 = arith.constant 0.000000e+00 : f32
    %143 = vector.broadcast %cst_53 : f32 to vector<8x1xf32>
    %144 = arith.cmpf olt, %140, %143 : vector<8x1xf32>
    %cst_54 = arith.constant 0.000000e+00 : f32
    %145 = arith.cmpf olt, %cst_51, %cst_54 : f32
    %146 = vector.broadcast %145 : i1 to vector<8x1xi1>
    %147 = vector.broadcast %146 : vector<8x1xi1> to vector<8x1xi1>
    %148 = arith.xori %144, %147 : vector<8x1xi1>
    %149 = arith.andi %148, %142 : vector<8x1xi1>
    %150 = vector.broadcast %cst_51 : f32 to vector<8x1xf32>
    %151 = arith.addf %140, %150 : vector<8x1xf32>
    %152 = arith.select %149, %151, %140 : vector<8x1xi1>, vector<8x1xf32>
    %c0_55 = arith.constant 0 : index
    %c0_56 = arith.constant 0 : index
    %153 = vector.load %arg4[%c0_55, %c0_56] : memref<8x1xf32, #tpu.memory_space<vmem>>, vector<8x1xf32>
    tpu.vector_store %arg4[%c0_55, %c0_56], %152 {strides = array<i32>} : memref<8x1xf32, #tpu.memory_space<vmem>>, vector<8x1xf32>,
    return
  }
  func.func @transform_0(%arg0: i32) -> (i32, i32) {
    %c0_i32 = arith.constant 0 : i32
    %c0_i32_0 = arith.constant 0 : i32
    return %arg0, %c0_i32 : i32, i32
  }
  func.func @transform_1(%arg0: i32) -> (i32, i32) {
    %c0_i32 = arith.constant 0 : i32
    %c0_i32_0 = arith.constant 0 : i32
    return %arg0, %c0_i32 : i32, i32
  }
  func.func @transform_2(%arg0: i32) -> (i32, i32) {
    %c0_i32 = arith.constant 0 : i32
    %c0_i32_0 = arith.constant 0 : i32
    return %arg0, %c0_i32 : i32, i32
  }
  func.func @transform_3(%arg0: i32) -> (i32, i32) {
    %c0_i32 = arith.constant 0 : i32
    %c0_i32_0 = arith.constant 0 : i32
    return %arg0, %c0_i32 : i32, i32
  }
}

</mosaic_0001>

<llo_original>
// kernel: tpu_custom_call.1
$region0: #{tpu_custom_call.1}
  #allocation0 [shape = 'u32[]', space=smem, size = 0x4, offset = 0x4, fixed_abs, tag = 'smem constant byte address 0x4 - core index']
  #allocation1 [shape = 'u32[72,128]{1,0:T(1,128)}', space=vmem, size = 0x9000, scoped, tag = 'internal scratch']
  %s0 = inlined_call_operand.vmem [shape: f32[8,128], index: 0, kind: input, shape index: {}]
  %s1 = inlined_call_operand.vmem [shape: f32[8,1], index: 1, kind: input, shape index: {}]
  %s2 = inlined_call_operand.hbm [shape: f32[8,128], index: 2, kind: output, shape index: {0}]
  %s3 = inlined_call_operand.vmem [shape: f32[8,1], index: 3, kind: output, shape index: {1}]
  %4 = xla_tuple %s2, %s3
  %s5 = sld [smem:[#allocation0]]
  $region26: #{tpu_custom_call.1} parent=0
    _
  %s7 = ssub.s32 1, %s5
  %s8 = scalar_select 0, %s7, %s5
  $region1: #{tpu_custom_call.1} parent=0
    #allocation2 [shape = 'u8[4096]{0}', space=vmem, size = 0x1000, scoped, tag = 'output window, operand 0, single buffered']
    #allocation3 [shape = 's32[1]{0}', space=sflag, size = 0x4, scoped, tag = 'scoped memory for tpu_custom_call.1']
    %9 = vsyncpa [#allocation3], 0
    // Predicated region
    $region2: #{tpu_custom_call.1} parent=1 // pred_check
      _
    $region3: #{tpu_custom_call.1} parent=1 // pred_check_branch
      %11 = sbr.rel (0) target = $region5
    $region4: #{tpu_custom_call.1} parent=1 // pred_region
      _
    $region5: #{tpu_custom_call.1} parent=1 // pred_fallthru
      _
    // Predicated region
    $region6: #{tpu_custom_call.1} parent=1 // pred_check
      _
    $region7: #{tpu_custom_call.1} parent=1 // pred_check_branch
      %13 = sbr.rel (0) target = $region9
    $region8: #{tpu_custom_call.1} parent=1 // pred_region
      _
    $region9: #{tpu_custom_call.1} parent=1 // pred_fallthru
      _
    %v14 = vld [vmem:[%s0] sm:$0xff]
    %v15 = vld [vmem:[%s1] sm:$0xff]
    %v16 = vmul.f32 %v14, 0.0003926991
    %v17 = vlaneseq
    %v18 = vand.u32 %v17, 127
    %19 = vrot.lane.b32.xlu0 %v16, 1
    %v20 = vpop.permute.xlu0 %19
    %vm21 = vcmp.ge.s32.totalorder %v18, 1
    %v22 = vsel %vm21, %v20, 0.0
    %v23 = vadd.f32 %v16, %v22
    %24 = vrot.lane.b32.xlu0 %v23, 2
    %v25 = vpop.permute.xlu0 %24
    %vm26 = vcmp.ge.s32.totalorder %v18, 2
    %v27 = vsel %vm26, %v25, 0.0
    %v28 = vadd.f32 %v23, %v27
    %29 = vrot.lane.b32.xlu0 %v28, 4
    %v30 = vpop.permute.xlu0 %29
    %vm31 = vcmp.ge.s32.totalorder %v18, 4
    %v32 = vsel %vm31, %v30, 0.0
    %v33 = vadd.f32 %v28, %v32
    %34 = vrot.lane.b32.xlu0 %v33, 8
    %v35 = vpop.permute.xlu0 %34
    %vm36 = vcmp.ge.s32.totalorder %v18, 8
    %v37 = vsel %vm36, %v35, 0.0
    %v38 = vadd.f32 %v33, %v37
    %39 = vrot.lane.b32.xlu0 %v38, 16
    %v40 = vpop.permute.xlu0 %39
    %vm41 = vcmp.ge.s32.totalorder %v18, 16
    %v42 = vsel %vm41, %v40, 0.0
    %v43 = vadd.f32 %v38, %v42
    %44 = vrot.lane.b32.xlu0 %v43, 32
    %v45 = vpop.permute.xlu0 %44
    %vm46 = vcmp.ge.s32.totalorder %v18, 32
    %v47 = vsel %vm46, %v45, 0.0
    %v48 = vadd.f32 %v43, %v47
    %49 = vrot.lane.b32.xlu0 %v48, 64
    %v50 = vpop.permute.xlu0 %49
    %vm51 = vcmp.ge.s32.totalorder %v18, 64
    %v52 = vsel %vm51, %v50, 0.0
    %v53 = vadd.f32 %v48, %v52
    %55 = vset.pattern.permute.xlu0 0
    %56 = vperm.xlu0 %55, %v15
    %v57 = vpop.permute.xlu0 %56
    %v59 = vadd.f32 %v53, %v57
    %v60 = vmul.f32 %v59, 0.15915494
    %v61 = vfloor.f32 %v60
    %v62 = vmul.f32 %v61, 6.2831855
    %v63 = vsub.f32 %v59, %v62
    %v64 = vand.u32 2147483647, %v63
    %vm65 = vcmp.le.f32.partialorder %v64, 0.7853982
    %vm66 = vcmp.lt.s32.totalorder %v63, 0
    %v67 = vand.u32 %v63, 2139095040
    %v68 = vshrl.u32 %v67, 23
    %v69 = vsub.s32 %v68, 127
    %v70 = vand.u32 2147483647, %v63
    %v71 = vand.u32 %v70, 8388607
    %v72 = vor.u32 %v71, 8388608
    %v73 = vsub.s32 0, %v72
    %v74 = vadd.s32 %v69, 1
    %vm75 = vcmp.gt.s32.totalorder %v74, 0
    %v76 = vsel %vm75, %v74, 0
    %v77 = vshrl.u32 %v76, 5
    %v78 = vand.u32 %v76, 31
    %v79 = vsub.s32 32, %v78
    %v80 = vshrl.u32 683565275, %v79
    %v81 = vshll.u32 683565275, %v78
    %v82 = vshrl.u32 2475754826, %v79
    %v83 = vor.u32 %v81, %v82
    %v84 = vshll.u32 2475754826, %v78
    %v85 = vshrl.u32 2131351028, %v79
    %v86 = vor.u32 %v84, %v85
    %v87 = vshll.u32 2131351028, %v78
    %v88 = vshrl.u32 2102212464, %v79
    %v89 = vor.u32 %v87, %v88
    %v90 = vshll.u32 2102212464, %v78
    %v91 = vshrl.u32 920167782, %v79
    %v92 = vor.u32 %v90, %v91
    %v93 = vshll.u32 920167782, %v78
    %v94 = vshrl.u32 1326507024, %v79
    %v95 = vor.u32 %v93, %v94
    %vm96 = vcmp.lt.s32.totalorder %v77, 1
    %vm97 = vcmp.lt.s32.totalorder %v77, 2
    %vm98 = vcmp.lt.s32.totalorder %v77, 3
    %vm99 = vcmp.lt.s32.totalorder %v77, 4
    %v100 = vsel %vm96, %v80, %v83
    %v101 = vsel %vm99, %v89, 2102212464
    %v102 = vsel %vm98, %v86, %v101
    %v103 = vsel %vm97, %v100, %v102
    %v104 = vsel %vm96, %v83, %v86
    %v105 = vsel %vm99, %v92, 920167782
    %v106 = vsel %vm98, %v89, %v105
    %v107 = vsel %vm97, %v104, %v106
    %v108 = vsel %vm96, %v86, %v89
    %v109 = vsel %vm99, %v95, 1326507024
    %v110 = vsel %vm98, %v92, %v109
    %v111 = vsel %vm97, %v108, %v110
    %v112 = vshll.u32 %v72, 8
    %v113 = vand.u32 %v112, 65535
    %v114 = vshrl.u32 %v112, 16
    %v115 = vand.u32 %v111, 65535
    %v116 = vshrl.u32 %v111, 16
    %v117 = vmul.u32 %v113, %v115
    %v118 = vmul.u32 %v113, %v116
    %v119 = vmul.u32 %v114, %v115
    %v120 = vmul.u32 %v114, %v116
    %v121 = vshll.u32 %v118, 16
    %v122 = vshrl.u32 %v118, 16
    %v123 = vshll.u32 %v119, 16
    %v124 = vshrl.u32 %v119, 16
    %vm125 = vc.u32 %v117, %v121
    %v126 = vsel %vm125, 1, 0
    %v127 = vadd.s32 %v117, %v121
    %v128 = vadd.s32 %v120, %v126
    %vm129 = vc.u32 %v127, %v123
    %v130 = vsel %vm129, 1, 0
    %v131 = vadd.s32 %v127, %v123
    %v132 = vadd.s32 %v128, %v130
    %v133 = vadd.s32 %v132, %v122
    %v134 = vadd.s32 %v133, %v124
    %v135 = vand.u32 %v112, 65535
    %v136 = vshrl.u32 %v112, 16
    %v137 = vand.u32 %v107, 65535
    %v138 = vshrl.u32 %v107, 16
    %v139 = vmul.u32 %v135, %v137
    %v140 = vmul.u32 %v135, %v138
    %v141 = vmul.u32 %v136, %v137
    %v142 = vmul.u32 %v136, %v138
    %v143 = vshll.u32 %v140, 16
    %v144 = vshrl.u32 %v140, 16
    %v145 = vshll.u32 %v141, 16
    %v146 = vshrl.u32 %v141, 16
    %vm147 = vc.u32 %v139, %v143
    %v148 = vsel %vm147, 1, 0
    %v149 = vadd.s32 %v139, %v143
    %v150 = vadd.s32 %v142, %v148
    %vm151 = vc.u32 %v149, %v145
    %v152 = vsel %vm151, 1, 0
    %v153 = vadd.s32 %v149, %v145
    %v154 = vadd.s32 %v150, %v152
    %v155 = vadd.s32 %v154, %v144
    %v156 = vadd.s32 %v155, %v146
    %v157 = vmul.u32 %v112, %v103
    %v158 = vadd.s32 %v134, %v153
    %vm159 = vc.u32 %v134, %v153
    %v160 = vadd.s32 %v156, 1
    %v161 = vsel %vm159, %v160, %v156
    %v162 = vadd.s32 %v157, %v161
    %v163 = vadd.s32 %v162, 536870912
    %v164 = vshrl.u32 %v163, 30
    %v165 = vshll.u32 %v164, 30
    %v166 = vsub.s32 %v162, %v165
    %vm167 = vcmp.lt.s32.totalorder %v166, 0
    %v168 = vsub.s32 0, %v166
    %v169 = vsel %vm167, %v168, %v166
    %v170 = vclz %v169
    %v171 = vsub.s32 %v170, 2
    %vm172 = vcmp.gt.s32.totalorder 0, %v171
    %v173 = vsel %vm172, 0, %v171
    %v174 = vsub.s32 32, %v173
    %v175 = vshll.u32 %v166, %v173
    %v176 = vshrl.u32 %v158, %v174
    %v177 = vor.u32 %v175, %v176
    %v178 = vsub.s32 4294967266, %v173
    %v179 = vadd.s32 %v178, 127
    %v180 = vshll.u32 %v179, 23
    %v181 = vor.u32 4788187, %v180
    %v182 = vand.u32 2147483647, %v181
    %v184 = vcvt.s32.f32 %v177
    %v185 = vmul.f32 %v184, %v182
    %v186 = vxor.u32 %v185, 2147483648
    %v187 = vsel %vm66, %v186, %v185
    %v188 = vsub.s32 4, %v164
    %v189 = vsel %vm66, %v188, %v164
    %v190 = vsel %vm65, %v63, %v187
    %v191 = vsel %vm65, 0, %v189
    %v192 = vmul.f32 %v190, %v190
    %v193 = vmul.f32 %v192, -0.001358992
    %v194 = vadd.f32 %v193, 0.041655596
    %v195 = vmul.f32 %v192, %v194
    %v196 = vadd.f32 %v195, -0.4999988
    %v197 = vmul.f32 %v192, %v196
    %v198 = vadd.f32 1.0, %v197
    %v199 = vmul.f32 %v190, %v190
    %v200 = vmul.f32 %v199, -0.00019511016
    %v201 = vadd.f32 %v200, 0.008332121
    %v202 = vmul.f32 %v199, %v201
    %v203 = vadd.f32 %v202, -0.16666654
    %v204 = vmul.f32 %v199, %v203
    %v205 = vadd.f32 %v204, 1.0
    %v206 = vmul.f32 %v205, %v190
    %vm207 = vweird.f32 %v63
    %v208 = vadd.s32 %v191, 3
    %v209 = vand.u32 %v208, 3
    %vm210 = vcmp.lt.s32.totalorder %v209, 2
    %vm211 = vcmp.eq.s32.totalorder %v209, 0
    %v212 = vxor.u32 %v206, 2147483648
    %v213 = vsel %vm211, %v198, %v212
    %vm214 = vcmp.eq.s32.totalorder %v209, 2
    %v215 = vxor.u32 %v198, 2147483648
    %v216 = vsel %vm214, %v215, %v206
    %v217 = vsel %vm210, %v213, %v216
    %v218 = vsel %vm207, nan, %v217
    %v219 = vand.u32 2147483647, %v63
    %vm220 = vcmp.le.f32.partialorder %v219, 0.7853982
    %vm221 = vcmp.lt.s32.totalorder %v63, 0
    %v222 = vand.u32 %v63, 2139095040
    %v223 = vshrl.u32 %v222, 23
    %v224 = vsub.s32 %v223, 127
    %v225 = vand.u32 2147483647, %v63
    %v226 = vand.u32 %v225, 8388607
    %v227 = vor.u32 %v226, 8388608
    %v228 = vsub.s32 0, %v227
    %v229 = vadd.s32 %v224, 1
    %vm230 = vcmp.gt.s32.totalorder %v229, 0
    %v231 = vsel %vm230, %v229, 0
    %v232 = vshrl.u32 %v231, 5
    %v233 = vand.u32 %v231, 31
    %v234 = vsub.s32 32, %v233
    %v235 = vshrl.u32 683565275, %v234
    %v236 = vshll.u32 683565275, %v233
    %v237 = vshrl.u32 2475754826, %v234
    %v238 = vor.u32 %v236, %v237
    %v239 = vshll.u32 2475754826, %v233
    %v240 = vshrl.u32 2131351028, %v234
    %v241 = vor.u32 %v239, %v240
    %v242 = vshll.u32 2131351028, %v233
    %v243 = vshrl.u32 2102212464, %v234
    %v244 = vor.u32 %v242, %v243
    %v245 = vshll.u32 2102212464, %v233
    %v246 = vshrl.u32 920167782, %v234
    %v247 = vor.u32 %v245, %v246
    %v248 = vshll.u32 920167782, %v233
    %v249 = vshrl.u32 1326507024, %v234
    %v250 = vor.u32 %v248, %v249
    %vm251 = vcmp.lt.s32.totalorder %v232, 1
    %vm252 = vcmp.lt.s32.totalorder %v232, 2
    %vm253 = vcmp.lt.s32.totalorder %v232, 3
    %vm254 = vcmp.lt.s32.totalorder %v232, 4
    %v255 = vsel %vm251, %v235, %v238
    %v256 = vsel %vm254, %v244, 2102212464
    %v257 = vsel %vm253, %v241, %v256
    %v258 = vsel %vm252, %v255, %v257
    %v259 = vsel %vm251, %v238, %v241
    %v260 = vsel %vm254, %v247, 920167782
    %v261 = vsel %vm253, %v244, %v260
    %v262 = vsel %vm252, %v259, %v261
    %v263 = vsel %vm251, %v241, %v244
    %v264 = vsel %vm254, %v250, 1326507024
    %v265 = vsel %vm253, %v247, %v264
    %v266 = vsel %vm252, %v263, %v265
    %v267 = vshll.u32 %v227, 8
    %v268 = vand.u32 %v267, 65535
    %v269 = vshrl.u32 %v267, 16
    %v270 = vand.u32 %v266, 65535
    %v271 = vshrl.u32 %v266, 16
    %v272 = vmul.u32 %v268, %v270
    %v273 = vmul.u32 %v268, %v271
    %v274 = vmul.u32 %v269, %v270
    %v275 = vmul.u32 %v269, %v271
    %v276 = vshll.u32 %v273, 16
    %v277 = vshrl.u32 %v273, 16
    %v278 = vshll.u32 %v274, 16
    %v279 = vshrl.u32 %v274, 16
    %vm280 = vc.u32 %v272, %v276
    %v281 = vsel %vm280, 1, 0
    %v282 = vadd.s32 %v272, %v276
    %v283 = vadd.s32 %v275, %v281
    %vm284 = vc.u32 %v282, %v278
    %v285 = vsel %vm284, 1, 0
    %v286 = vadd.s32 %v282, %v278
    %v287 = vadd.s32 %v283, %v285
    %v288 = vadd.s32 %v287, %v277
    %v289 = vadd.s32 %v288, %v279
    %v290 = vand.u32 %v267, 65535
    %v291 = vshrl.u32 %v267, 16
    %v292 = vand.u32 %v262, 65535
    %v293 = vshrl.u32 %v262, 16
    %v294 = vmul.u32 %v290, %v292
    %v295 = vmul.u32 %v290, %v293
    %v296 = vmul.u32 %v291, %v292
    %v297 = vmul.u32 %v291, %v293
    %v298 = vshll.u32 %v295, 16
    %v299 = vshrl.u32 %v295, 16
    %v300 = vshll.u32 %v296, 16
    %v301 = vshrl.u32 %v296, 16
    %vm302 = vc.u32 %v294, %v298
    %v303 = vsel %vm302, 1, 0
    %v304 = vadd.s32 %v294, %v298
    %v305 = vadd.s32 %v297, %v303
    %vm306 = vc.u32 %v304, %v300
    %v307 = vsel %vm306, 1, 0
    %v308 = vadd.s32 %v304, %v300
    %v309 = vadd.s32 %v305, %v307
    %v310 = vadd.s32 %v309, %v299
    %v311 = vadd.s32 %v310, %v301
    %v312 = vmul.u32 %v267, %v258
    %v313 = vadd.s32 %v289, %v308
    %vm314 = vc.u32 %v289, %v308
    %v315 = vadd.s32 %v311, 1
    %v316 = vsel %vm314, %v315, %v311
    %v317 = vadd.s32 %v312, %v316
    %v318 = vadd.s32 %v317, 536870912
    %v319 = vshrl.u32 %v318, 30
    %v320 = vshll.u32 %v319, 30
    %v321 = vsub.s32 %v317, %v320
    %vm322 = vcmp.lt.s32.totalorder %v321, 0
    %v323 = vsub.s32 0, %v321
    %v324 = vsel %vm322, %v323, %v321
    %v325 = vclz %v324
    %v326 = vsub.s32 %v325, 2
    %vm327 = vcmp.gt.s32.totalorder 0, %v326
    %v328 = vsel %vm327, 0, %v326
    %v329 = vsub.s32 32, %v328
    %v330 = vshll.u32 %v321, %v328
    %v331 = vshrl.u32 %v313, %v329
    %v332 = vor.u32 %v330, %v331
    %v333 = vsub.s32 4294967266, %v328
    %v334 = vadd.s32 %v333, 127
    %v335 = vshll.u32 %v334, 23
    %v336 = vor.u32 4788187, %v335
    %v337 = vand.u32 2147483647, %v336
    %v339 = vcvt.s32.f32 %v332
    %v340 = vmul.f32 %v339, %v337
    %v341 = vxor.u32 %v340, 2147483648
    %v342 = vsel %vm221, %v341, %v340
    %v343 = vsub.s32 4, %v319
    %v344 = vsel %vm221, %v343, %v319
    %v345 = vsel %vm220, %v63, %v342
    %v346 = vsel %vm220, 0, %v344
    %v347 = vmul.f32 %v345, %v345
    %v348 = vmul.f32 %v347, -0.001358992
    %v349 = vadd.f32 %v348, 0.041655596
    %v350 = vmul.f32 %v347, %v349
    %v351 = vadd.f32 %v350, -0.4999988
    %v352 = vmul.f32 %v347, %v351
    %v353 = vadd.f32 1.0, %v352
    %v354 = vmul.f32 %v345, %v345
    %v355 = vmul.f32 %v354, -0.00019511016
    %v356 = vadd.f32 %v355, 0.008332121
    %v357 = vmul.f32 %v354, %v356
    %v358 = vadd.f32 %v357, -0.16666654
    %v359 = vmul.f32 %v354, %v358
    %v360 = vadd.f32 %v359, 1.0
    %v361 = vmul.f32 %v360, %v345
    %vm362 = vweird.f32 %v63
    %v363 = vand.u32 %v346, 3
    %vm364 = vcmp.lt.s32.totalorder %v363, 2
    %vm365 = vcmp.eq.s32.totalorder %v363, 0
    %v366 = vxor.u32 %v361, 2147483648
    %v367 = vsel %vm365, %v353, %v366
    %vm368 = vcmp.eq.s32.totalorder %v363, 2
    %v369 = vxor.u32 %v353, 2147483648
    %v370 = vsel %vm368, %v369, %v361
    %v371 = vsel %vm364, %v367, %v370
    %v372 = vsel %vm362, nan, %v371
    %v373 = vmul.f32 %v372, 2.0
    %vm374 = vcmp.lt.f32.partialorder %v14, 8000.0
    %v375 = vsel %vm374, 0.250025, 2.5e-05
    %v376 = vmul.f32 %v375, %v218
    %v377 = vadd.f32 %v376, 0.0
    %v378 = vmul.f32 %v373, %v218
    %vm379 = vcmp.lt.f32.partialorder %v14, 4000.0
    %v380 = vsel %vm379, 0.1250125, 1.25e-05
    %v381 = vmul.f32 %v380, %v378
    %v382 = vadd.f32 %v377, %v381
    %v383 = vmul.f32 %v373, %v378
    %v384 = vsub.f32 %v383, %v218
    %vm385 = vcmp.lt.f32.partialorder %v14, 2666.6667
    %v386 = vsel %vm385, 0.083341666, 8.333333e-06
    %v387 = vmul.f32 %v386, %v384
    %v388 = vadd.f32 %v382, %v387
    %v389 = vmul.f32 %v373, %v384
    %v390 = vsub.f32 %v389, %v378
    %vm391 = vcmp.lt.f32.partialorder %v14, 2000.0
    %v392 = vsel %vm391, 0.06250625, 6.25e-06
    %v393 = vmul.f32 %v392, %v390
    %v394 = vadd.f32 %v388, %v393
    %v395 = vmul.f32 %v373, %v390
    %v396 = vsub.f32 %v395, %v384
    %vm397 = vcmp.lt.f32.partialorder %v14, 1600.0
    %v398 = vsel %vm397, 0.050005, 5e-06
    %v399 = vmul.f32 %v398, %v396
    %v400 = vadd.f32 %v394, %v399
    %v401 = vmul.f32 %v373, %v396
    %v402 = vsub.f32 %v401, %v390
    %vm403 = vcmp.lt.f32.partialorder %v14, 1333.3334
    %v404 = vsel %vm403, 0.041670833, 4.1666667e-06
    %v405 = vmul.f32 %v404, %v402
    %v406 = vadd.f32 %v400, %v405
    %v407 = vmul.f32 %v373, %v402
    %v408 = vsub.f32 %v407, %v396
    %vm409 = vcmp.lt.f32.partialorder %v14, 1142.8572
    %v410 = vsel %vm409, 0.03571786, 3.5714288e-06
    %v411 = vmul.f32 %v410, %v408
    %v412 = vadd.f32 %v406, %v411
    %v413 = vmul.f32 %v373, %v408
    %v414 = vsub.f32 %v413, %v402
    %vm415 = vcmp.lt.f32.partialorder %v14, 1000.0
    %v416 = vsel %vm415, 0.031253126, 3.125e-06
    %v417 = vmul.f32 %v416, %v414
    %v418 = vadd.f32 %v412, %v417
    %vm419 = vcmp.gt.f32.partialorder %v14, 0.0
    %v420 = vsel %vm419, %v418, 0.0
    %421 = vst [vmem:[#allocation2] sm:$0xff] %v420
    %422 = vadd.xlane.f32.xlu0 %v16
    %v423 = vpop.xlane.xlu0 %422
    %v424 = vadd.f32 %v423, %v15
    %v425 = vand.u32 2147483647, %v424
    %v426 = vrcp.pop 6.2831855
    %v427 = vmul.f32 6.2831855, %v426
    %v428 = vsub.f32 1.0, %v427
    %v429 = vmul.f32 %v426, %v428
    %v430 = vadd.f32 %v426, %v429
    %vm431 = vweird.f32 %v426
    %v432 = vsel %vm431, %v426, %v430
    %v433 = vmul.f32 %v425, %v432
    %v434 = vfloor.f32 %v433
    %v435 = vmul.f32 %v434, 6.2831855
    %v436 = vsub.f32 %v425, %v435
    %vm437 = vcmp.eq.f32.partialorder %v436, 6.2831855
    %v438 = vsel %vm437, 0.0, %v436
    %v439 = vand.u32 2147483647, %v438
    %v440 = vand.u32 %v424, 2147483648
    %v441 = vor.u32 %v439, %v440
    %vm442 = vcmp.ne.f32.partialorder %v441, 0.0
    %vm443 = vcmp.lt.f32.partialorder %v441, 0.0
    %vm444 = vmand %vm443, %vm442
    %v445 = vadd.f32 %v441, 6.2831855
    %v446 = vsel %vm444, %v445, %v441
    %vm447 = vcmask 7168
    %448 = vst.msk [vmem:[%s3] sm:$0xff] %vm447, %v446
    // Predicated region
    $region10: #{tpu_custom_call.1} parent=1 // pred_check
      _
    $region11: #{tpu_custom_call.1} parent=1 // pred_check_branch
      %450 = sbr.rel (0) target = $region13
    $region12: #{tpu_custom_call.1} parent=1 // pred_region
      %452 = vsyncadd [#allocation3], 0
      %s454 = sshll.u32 [#allocation2], 4
      %s455 = int_to_ptr.vmem [resolvable:$true] %s454
      %s456 = sshll.u32 %s2, 4
      %s457 = int_to_ptr.hbm [resolvable:$true] %s456
      %459 = dma.vmem_to_hbm [thread:$0]  %s455, 128, %s457, [#allocation3]
    $region13: #{tpu_custom_call.1} parent=1 // pred_fallthru
      _
    // Predicated region
    $region14: #{tpu_custom_call.1} parent=1 // pred_check
      _
    $region15: #{tpu_custom_call.1} parent=1 // pred_check_branch
      %461 = sbr.rel (0) target = $region17
    $region16: #{tpu_custom_call.1} parent=1 // pred_region
      _
    $region17: #{tpu_custom_call.1} parent=1 // pred_fallthru
      _
    // Predicated region
    $region18: #{tpu_custom_call.1} parent=1 // pred_check
      _
    $region19: #{tpu_custom_call.1} parent=1 // pred_check_branch
      %463 = sbr.rel (0) target = $region21
    $region20: #{tpu_custom_call.1} parent=1 // pred_region
      %465 = dma.done [#allocation3], 128
    $region21: #{tpu_custom_call.1} parent=1 // pred_fallthru
      _
    // Predicated region
    $region22: #{tpu_custom_call.1} parent=1 // pred_check
      _
    $region23: #{tpu_custom_call.1} parent=1 // pred_check_branch
      %467 = sbr.rel (0) target = $region25
    $region24: #{tpu_custom_call.1} parent=1 // pred_region
      _
    $region25: #{tpu_custom_call.1} parent=1 // pred_fallthru
      _
    %468 = vsyncpa [#allocation3], 1

</llo_original>
